<compile_context>
chip_gen: v7x
topology: tpu7x:2x2x1
jax: 0.10.0
libtpu: 0.0.40
codegen_flags: <defaults>
</compile_context>

<pallas_src>
import functools

import jax
import jax.numpy as jnp
from jax.experimental import pallas as pl
from jax.experimental.pallas import tpu as pltpu

INPUT_DIM = 56
HIDDEN1 = 64
HIDDEN2 = 32
OUT_DIM = 2
OUT_PAD = 128  # lane-dense padded output width (>=128 -> unmasked stores)


def _round_up(x, m):
    return ((x + m - 1) // m) * m


def _mlp_kernel(x_ref, w1_ref, b1_ref, w2_ref, b2_ref, w3_ref, b3_ref, o_ref):
    # Whole hot path (3 matmuls + 2 ReLUs + bias adds) lives in the kernel.
    # Inputs/weights are bf16; accumulation is f32; biases are f32.
    x = x_ref[...]
    h1 = jnp.dot(x, w1_ref[...], preferred_element_type=jnp.float32) + b1_ref[...]
    h1 = jnp.maximum(h1, 0.0).astype(jnp.bfloat16)
    h2 = jnp.dot(h1, w2_ref[...], preferred_element_type=jnp.float32) + b2_ref[...]
    h2 = jnp.maximum(h2, 0.0).astype(jnp.bfloat16)
    out = jnp.dot(h2, w3_ref[...], preferred_element_type=jnp.float32) + b3_ref[...]
    o_ref[...] = out.astype(o_ref.dtype)


@functools.partial(jax.jit, static_argnames=("block_b",))
def enhanced_classifier_forward(x, params, *, block_b=1024):
    """x: (B, INPUT_DIM) float32. Returns (B, 2) float32 logits."""
    w1, b1, w2, b2, w3, b3 = params
    B = x.shape[0]

    # Effective batch tile: as large as block_b, but small enough that the grid
    # has >=2 steps when the batch allows it (uses both TensorCores on v7x).
    bb = min(block_b, max(8, _round_up(pl.cdiv(B, 2), 8)))
    B_pad = _round_up(B, bb)
    grid = (B_pad // bb,)

    # Stream activations/weights as bf16 (f32 accumulation inside the kernel).
    x_bf = x.astype(jnp.bfloat16)
    if B_pad != B:
        x_bf = jnp.pad(x_bf, ((0, B_pad - B), (0, 0)))

    w1_bf = w1.astype(jnp.bfloat16)
    w2_bf = w2.astype(jnp.bfloat16)
    # Pad the last layer to a lane-dense width (zero columns -> logits unchanged).
    w3_bf = jnp.pad(w3, ((0, 0), (0, OUT_PAD - OUT_DIM))).astype(jnp.bfloat16)
    b3_pad = jnp.pad(b3, ((0, 0), (0, OUT_PAD - OUT_DIM)))
    b1_f32 = b1.astype(jnp.float32)
    b2_f32 = b2.astype(jnp.float32)

    flops_per_row = 2 * (INPUT_DIM * HIDDEN1 + HIDDEN1 * HIDDEN2 + HIDDEN2 * OUT_PAD)
    bytes_accessed = (
        B_pad * INPUT_DIM * 2            # x (bf16)
        + B_pad * OUT_PAD * 4            # padded output (f32)
        + (INPUT_DIM * HIDDEN1 + HIDDEN1 * HIDDEN2 + HIDDEN2 * OUT_PAD) * 2  # weights
        + (HIDDEN1 + HIDDEN2 + OUT_PAD) * 4                                  # biases
    )

    out_pad = pl.pallas_call(
        _mlp_kernel,
        out_shape=jax.ShapeDtypeStruct((B_pad, OUT_PAD), jnp.float32),
        grid_spec=pltpu.PrefetchScalarGridSpec(
            num_scalar_prefetch=0,
            grid=grid,
            in_specs=[
                # x: tile over batch, full feature dim
                pl.BlockSpec((bb, INPUT_DIM), lambda i: (i, 0)),
                # weights / biases: full arrays, same block every step
                pl.BlockSpec((INPUT_DIM, HIDDEN1), lambda i: (0, 0)),
                pl.BlockSpec((1, HIDDEN1), lambda i: (0, 0)),
                pl.BlockSpec((HIDDEN1, HIDDEN2), lambda i: (0, 0)),
                pl.BlockSpec((1, HIDDEN2), lambda i: (0, 0)),
                pl.BlockSpec((HIDDEN2, OUT_PAD), lambda i: (0, 0)),
                pl.BlockSpec((1, OUT_PAD), lambda i: (0, 0)),
            ],
            out_specs=pl.BlockSpec((bb, OUT_PAD), lambda i: (i, 0)),
        ),
        compiler_params=pltpu.CompilerParams(
            dimension_semantics=("parallel",),
        ),
        cost_estimate=pl.CostEstimate(
            flops=B_pad * flops_per_row,
            transcendentals=0,
            bytes_accessed=bytes_accessed,
        ),
    )(x_bf, w1_bf, b1_f32, w2_bf, b2_f32, w3_bf, b3_pad)

    # Slice padded rows / padded output columns back to the real logits.
    return out_pad[:B, :OUT_DIM]


def init_params(key):
    """Deterministic parameter init (Kaiming-uniform-like, as nn.Linear default)."""
    ks = jax.random.split(key, 6)

    def linear_init(kw, kb, fan_in, fan_out):
        bound = 1.0 / jnp.sqrt(fan_in)
        w = jax.random.uniform(kw, (fan_in, fan_out), jnp.float32, -bound, bound)
        b = jax.random.uniform(kb, (1, fan_out), jnp.float32, -bound, bound)
        return w, b

    w1, b1 = linear_init(ks[0], ks[1], INPUT_DIM, HIDDEN1)
    w2, b2 = linear_init(ks[2], ks[3], HIDDEN1, HIDDEN2)
    w3, b3 = linear_init(ks[4], ks[5], HIDDEN2, OUT_DIM)
    return (w1, b1, w2, b2, w3, b3)


def reference_forward(x, params):
    """Pure-f32 reference matching the PyTorch module semantics."""
    w1, b1, w2, b2, w3, b3 = params
    h1 = jnp.maximum(x @ w1 + b1, 0.0)
    h2 = jnp.maximum(h1 @ w2 + b2, 0.0)
    return h2 @ w3 + b3


if __name__ == "__main__":
    key = jax.random.PRNGKey(0)
    k_x, k_p = jax.random.split(key)

    batch = 16  # small demo batch; wrapper tiles/pads for any B
    x = jax.random.normal(k_x, (batch, INPUT_DIM), jnp.float32)
    params = init_params(k_p)

    out = enhanced_classifier_forward(x, params)
    out = jax.block_until_ready(out)

    ref = reference_forward(x, params)
    assert out.shape == (batch, OUT_DIM)
    # bf16 streaming with f32 accumulation -> relaxed tolerance vs f32 reference.
    assert jnp.allclose(out, ref, atol=5e-2, rtol=5e-2), "mismatch vs reference"

    print("KERNEL_OK")
</pallas_src>

<mosaic_0001>
module attributes {stable_mosaic.version = 11 : i64} {
  func.func @_mlp_kernel(%arg0: i32, %arg1: memref<8x56xbf16, #tpu.memory_space<vmem>>, %arg2: memref<56x64xbf16, #tpu.memory_space<vmem>>, %arg3: memref<1x64xf32, #tpu.memory_space<vmem>>, %arg4: memref<64x32xbf16, #tpu.memory_space<vmem>>, %arg5: memref<1x32xf32, #tpu.memory_space<vmem>>, %arg6: memref<32x128xbf16, #tpu.memory_space<vmem>>, %arg7: memref<1x128xf32, #tpu.memory_space<vmem>>, %arg8: memref<8x128xf32, #tpu.memory_space<vmem>>) attributes {dimension_semantics = [#tpu.dimension_semantics<parallel>], iteration_bounds = array<i64: 2>, scalar_prefetch = 0 : i64, scratch_operands = 0 : i64, tpu.core_type = #tpu.core_type<tc>, window_params = [{transform_indices = @transform_0, window_bounds = array<i64: 8, 56>}, {pipeline_mode = #tpu.pipeline_mode<synchronous>, transform_indices = @transform_1, window_bounds = array<i64: 56, 64>}, {pipeline_mode = #tpu.pipeline_mode<synchronous>, transform_indices = @transform_2, window_bounds = array<i64: 1, 64>}, {pipeline_mode = #tpu.pipeline_mode<synchronous>, transform_indices = @transform_3, window_bounds = array<i64: 64, 32>}, {pipeline_mode = #tpu.pipeline_mode<synchronous>, transform_indices = @transform_4, window_bounds = array<i64: 1, 32>}, {pipeline_mode = #tpu.pipeline_mode<synchronous>, transform_indices = @transform_5, window_bounds = array<i64: 32, 128>}, {pipeline_mode = #tpu.pipeline_mode<synchronous>, transform_indices = @transform_6, window_bounds = array<i64: 1, 128>}, {transform_indices = @transform_7, window_bounds = array<i64: 8, 128>}]} {
    %c0 = arith.constant 0 : index
    %c0_0 = arith.constant 0 : index
    %0 = vector.load %arg1[%c0, %c0_0] : memref<8x56xbf16, #tpu.memory_space<vmem>>, vector<8x56xbf16>
    %c0_1 = arith.constant 0 : index
    %c0_2 = arith.constant 0 : index
    %1 = vector.load %arg2[%c0_1, %c0_2] : memref<56x64xbf16, #tpu.memory_space<vmem>>, vector<56x64xbf16>
    %cst = arith.constant dense<0.000000e+00> : vector<8x64xf32>
    %2 = tpu.matmul %0, %1, %cst {dimension_numbers = #tpu.dot_dimension_numbers<[1], [0], [0], [1], [0, 0, 1, 1], [], []>} : vector<8x56xbf16>, vector<56x64xbf16>, vector<8x64xf32> -> vector<8x64xf32>
    %c0_3 = arith.constant 0 : index
    %c0_4 = arith.constant 0 : index
    %3 = vector.load %arg3[%c0_3, %c0_4] : memref<1x64xf32, #tpu.memory_space<vmem>>, vector<1x64xf32>
    %4 = vector.broadcast %3 : vector<1x64xf32> to vector<8x64xf32>
    %5 = arith.addf %2, %4 : vector<8x64xf32>
    %cst_5 = arith.constant 0.000000e+00 : f32
    %6 = vector.broadcast %cst_5 : f32 to vector<8x64xf32>
    %7 = arith.maximumf %5, %6 : vector<8x64xf32>
    %8 = arith.truncf %7 : vector<8x64xf32> to vector<8x64xbf16>
    %c0_6 = arith.constant 0 : index
    %c0_7 = arith.constant 0 : index
    %9 = vector.load %arg4[%c0_6, %c0_7] : memref<64x32xbf16, #tpu.memory_space<vmem>>, vector<64x32xbf16>
    %cst_8 = arith.constant dense<0.000000e+00> : vector<8x32xf32>
    %10 = tpu.matmul %8, %9, %cst_8 {dimension_numbers = #tpu.dot_dimension_numbers<[1], [0], [0], [1], [0, 0, 1, 1], [], []>} : vector<8x64xbf16>, vector<64x32xbf16>, vector<8x32xf32> -> vector<8x32xf32>
    %c0_9 = arith.constant 0 : index
    %c0_10 = arith.constant 0 : index
    %11 = vector.load %arg5[%c0_9, %c0_10] : memref<1x32xf32, #tpu.memory_space<vmem>>, vector<1x32xf32>
    %12 = vector.broadcast %11 : vector<1x32xf32> to vector<8x32xf32>
    %13 = arith.addf %10, %12 : vector<8x32xf32>
    %cst_11 = arith.constant 0.000000e+00 : f32
    %14 = vector.broadcast %cst_11 : f32 to vector<8x32xf32>
    %15 = arith.maximumf %13, %14 : vector<8x32xf32>
    %16 = arith.truncf %15 : vector<8x32xf32> to vector<8x32xbf16>
    %c0_12 = arith.constant 0 : index
    %c0_13 = arith.constant 0 : index
    %17 = vector.load %arg6[%c0_12, %c0_13] : memref<32x128xbf16, #tpu.memory_space<vmem>>, vector<32x128xbf16>
    %cst_14 = arith.constant dense<0.000000e+00> : vector<8x128xf32>
    %18 = tpu.matmul %16, %17, %cst_14 {dimension_numbers = #tpu.dot_dimension_numbers<[1], [0], [0], [1], [0, 0, 1, 1], [], []>} : vector<8x32xbf16>, vector<32x128xbf16>, vector<8x128xf32> -> vector<8x128xf32>
    %c0_15 = arith.constant 0 : index
    %c0_16 = arith.constant 0 : index
    %19 = vector.load %arg7[%c0_15, %c0_16] : memref<1x128xf32, #tpu.memory_space<vmem>>, vector<1x128xf32>
    %20 = vector.broadcast %19 : vector<1x128xf32> to vector<8x128xf32>
    %21 = arith.addf %18, %20 : vector<8x128xf32>
    %c0_17 = arith.constant 0 : index
    %c0_18 = arith.constant 0 : index
    %22 = vector.load %arg8[%c0_17, %c0_18] : memref<8x128xf32, #tpu.memory_space<vmem>>, vector<8x128xf32>
    tpu.vector_store %arg8[%c0_17, %c0_18], %21 {strides = array<i32>} : memref<8x128xf32, #tpu.memory_space<vmem>>, vector<8x128xf32>,
    return
  }
  func.func @transform_0(%arg0: i32) -> (i32, i32) {
    %c0_i32 = arith.constant 0 : i32
    %c0_i32_0 = arith.constant 0 : i32
    return %arg0, %c0_i32 : i32, i32
  }
  func.func @transform_1(%arg0: i32) -> (i32, i32) {
    %c0_i32 = arith.constant 0 : i32
    %c0_i32_0 = arith.constant 0 : i32
    %c0_i32_1 = arith.constant 0 : i32
    return %c0_i32, %c0_i32_0 : i32, i32
  }
  func.func @transform_2(%arg0: i32) -> (i32, i32) {
    %c0_i32 = arith.constant 0 : i32
    %c0_i32_0 = arith.constant 0 : i32
    %c0_i32_1 = arith.constant 0 : i32
    return %c0_i32, %c0_i32_0 : i32, i32
  }
  func.func @transform_3(%arg0: i32) -> (i32, i32) {
    %c0_i32 = arith.constant 0 : i32
    %c0_i32_0 = arith.constant 0 : i32
    %c0_i32_1 = arith.constant 0 : i32
    return %c0_i32, %c0_i32_0 : i32, i32
  }
  func.func @transform_4(%arg0: i32) -> (i32, i32) {
    %c0_i32 = arith.constant 0 : i32
    %c0_i32_0 = arith.constant 0 : i32
    %c0_i32_1 = arith.constant 0 : i32
    return %c0_i32, %c0_i32_0 : i32, i32
  }
  func.func @transform_5(%arg0: i32) -> (i32, i32) {
    %c0_i32 = arith.constant 0 : i32
    %c0_i32_0 = arith.constant 0 : i32
    %c0_i32_1 = arith.constant 0 : i32
    return %c0_i32, %c0_i32_0 : i32, i32
  }
  func.func @transform_6(%arg0: i32) -> (i32, i32) {
    %c0_i32 = arith.constant 0 : i32
    %c0_i32_0 = arith.constant 0 : i32
    %c0_i32_1 = arith.constant 0 : i32
    return %c0_i32, %c0_i32_0 : i32, i32
  }
  func.func @transform_7(%arg0: i32) -> (i32, i32) {
    %c0_i32 = arith.constant 0 : i32
    %c0_i32_0 = arith.constant 0 : i32
    return %arg0, %c0_i32 : i32, i32
  }
}

</mosaic_0001>

<llo_original>
// kernel: enhanced_classifier_forward.1
$region0: #{enhanced_classifier_forward.1}
  #allocation0 [shape = 'u32[]', space=smem, size = 0x4, offset = 0x4, fixed_abs, tag = 'smem constant byte address 0x4 - core index']
  #allocation1 [shape = 'u32[144,128]{1,0:T(1,128)}', space=vmem, size = 0x12000, scoped, tag = 'internal scratch']
  %s0 = inlined_call_operand.vmem [shape: bf16[16,56], index: 0, kind: input, shape index: {}]
  %s1 = inlined_call_operand.vmem [shape: bf16[56,64], index: 1, kind: input, shape index: {}]
  %s2 = inlined_call_operand.vmem [shape: f32[1,64], index: 2, kind: input, shape index: {}]
  %s3 = inlined_call_operand.vmem [shape: bf16[64,32], index: 3, kind: input, shape index: {}]
  %s4 = inlined_call_operand.vmem [shape: f32[1,32], index: 4, kind: input, shape index: {}]
  %s5 = inlined_call_operand.vmem [shape: bf16[32,128], index: 5, kind: input, shape index: {}]
  %s6 = inlined_call_operand.vmem [shape: f32[1,128], index: 6, kind: input, shape index: {}]
  %s7 = inlined_call_operand.vmem [shape: f32[16,128], index: 7, kind: output, shape index: {}]
  %s8 = sld [smem:[#allocation0]]
  $region61: #{enhanced_classifier_forward.1} parent=0
    _
  %s10 = ssub.s32 1, %s8
  %s11 = scalar_select 0, %s10, %s8
  loop: start=0, step=1, limit=4
  $region2: #{enhanced_classifier_forward.1} parent=0 // loop_pre_header
    _
  $region3: #{enhanced_classifier_forward.1} parent=0 // loop_header
    %s13 = sphi 0, %s17
    %p14 = scmp.ge.s32.totalorder %s13, 4
    %s23 = sphi 0, %s25
    %s26 = sphi 0, %s23
    %s27 = sphi 0, %s26
    %s43 = sphi 0, %s27
    %s47 = sphi 0, %s47
    %s49 = sphi 0, %s47
    %s50 = sphi 0, %s49
    %s64 = sphi 0, %s50
    %s68 = sphi 0, %s68
    %s70 = sphi 0, %s68
    %s71 = sphi 0, %s70
    %s85 = sphi 0, %s71
    %s89 = sphi 0, %s89
    %s91 = sphi 0, %s89
    %s92 = sphi 0, %s91
    %s106 = sphi 0, %s92
    %s110 = sphi 0, %s110
    %s112 = sphi 0, %s110
    %s113 = sphi 0, %s112
    %s127 = sphi 0, %s113
    %s131 = sphi 0, %s131
    %s133 = sphi 0, %s131
    %s134 = sphi 0, %s133
    %s148 = sphi 0, %s134
    %s152 = sphi 0, %s152
    %s154 = sphi 0, %s152
    %s155 = sphi 0, %s154
    %s169 = sphi 0, %s155
    %s175 = sphi 0, %s177
    %s178 = sphi 0, %s175
    %s179 = sphi 0, %s178
    %s195 = sphi 0, %s179
  $region4: #{enhanced_classifier_forward.1} parent=0 // loop_header_branch
    %16 = sbr.rel (%p14) target = $region8
  $region5: #{enhanced_classifier_forward.1} parent=0 // loop_body
    %s18 = ssub.s32 %s13, 1
    %s19 = ssub.s32 %s13, 2
    %s20 = sadd.s32 %s13, 1
    %s21 = ssub.s32 %s13, %s20
    %p22 = scmp.eq.s32.totalorder %s21, 0
    %s24 = sadd.s32 %s23, 1
    %s25 = scalar_select %p22, %s23, %s24
    %p28 = pneg %p22
    %p29 = scmp.eq.s32.totalorder %s13, 1
    %p30 = por %p28, %p29
    %p31 = scmp.ne.s32.totalorder %s23, %s26
    %p32 = scmp.eq.s32.totalorder %s13, 0
    %p33 = por %p31, %p32
    %p34 = scmp.ne.s32.totalorder %s23, %s26
    %p35 = scmp.eq.s32.totalorder %s18, 1
    %p36 = por %p34, %p35
    %p37 = scmp.ne.s32.totalorder %s26, %s27
    %p38 = scmp.eq.s32.totalorder %s18, 0
    %p39 = por %p37, %p38
    %p40 = scmp.ne.s32.totalorder %s26, %s27
    %p41 = scmp.eq.s32.totalorder %s19, 1
    %p42 = por %p40, %p41
    %p44 = scmp.ne.s32.totalorder %s27, %s43
    %p45 = scmp.eq.s32.totalorder %s19, 0
    %p46 = por %p44, %p45
    %s48 = sadd.s32 %s47, 1
    %p51 = scmp.eq.s32.totalorder %s13, 1
    %p52 = scmp.ne.s32.totalorder %s47, %s49
    %p53 = scmp.eq.s32.totalorder %s13, 0
    %p54 = por %p52, %p53
    %p55 = scmp.ne.s32.totalorder %s47, %s49
    %p56 = scmp.eq.s32.totalorder %s18, 1
    %p57 = por %p55, %p56
    %p58 = scmp.ne.s32.totalorder %s49, %s50
    %p59 = scmp.eq.s32.totalorder %s18, 0
    %p60 = por %p58, %p59
    %p61 = scmp.ne.s32.totalorder %s49, %s50
    %p62 = scmp.eq.s32.totalorder %s19, 1
    %p63 = por %p61, %p62
    %p65 = scmp.ne.s32.totalorder %s50, %s64
    %p66 = scmp.eq.s32.totalorder %s19, 0
    %p67 = por %p65, %p66
    %s69 = sadd.s32 %s68, 1
    %p72 = scmp.eq.s32.totalorder %s13, 1
    %p73 = scmp.ne.s32.totalorder %s68, %s70
    %p74 = scmp.eq.s32.totalorder %s13, 0
    %p75 = por %p73, %p74
    %p76 = scmp.ne.s32.totalorder %s68, %s70
    %p77 = scmp.eq.s32.totalorder %s18, 1
    %p78 = por %p76, %p77
    %p79 = scmp.ne.s32.totalorder %s70, %s71
    %p80 = scmp.eq.s32.totalorder %s18, 0
    %p81 = por %p79, %p80
    %p82 = scmp.ne.s32.totalorder %s70, %s71
    %p83 = scmp.eq.s32.totalorder %s19, 1
    %p84 = por %p82, %p83
    %p86 = scmp.ne.s32.totalorder %s71, %s85
    %p87 = scmp.eq.s32.totalorder %s19, 0
    %p88 = por %p86, %p87
    %s90 = sadd.s32 %s89, 1
    %p93 = scmp.eq.s32.totalorder %s13, 1
    %p94 = scmp.ne.s32.totalorder %s89, %s91
    %p95 = scmp.eq.s32.totalorder %s13, 0
    %p96 = por %p94, %p95
    %p97 = scmp.ne.s32.totalorder %s89, %s91
    %p98 = scmp.eq.s32.totalorder %s18, 1
    %p99 = por %p97, %p98
    %p100 = scmp.ne.s32.totalorder %s91, %s92
    %p101 = scmp.eq.s32.totalorder %s18, 0
    %p102 = por %p100, %p101
    %p103 = scmp.ne.s32.totalorder %s91, %s92
    %p104 = scmp.eq.s32.totalorder %s19, 1
    %p105 = por %p103, %p104
    %p107 = scmp.ne.s32.totalorder %s92, %s106
    %p108 = scmp.eq.s32.totalorder %s19, 0
    %p109 = por %p107, %p108
    %s111 = sadd.s32 %s110, 1
    %p114 = scmp.eq.s32.totalorder %s13, 1
    %p115 = scmp.ne.s32.totalorder %s110, %s112
    %p116 = scmp.eq.s32.totalorder %s13, 0
    %p117 = por %p115, %p116
    %p118 = scmp.ne.s32.totalorder %s110, %s112
    %p119 = scmp.eq.s32.totalorder %s18, 1
    %p120 = por %p118, %p119
    %p121 = scmp.ne.s32.totalorder %s112, %s113
    %p122 = scmp.eq.s32.totalorder %s18, 0
    %p123 = por %p121, %p122
    %p124 = scmp.ne.s32.totalorder %s112, %s113
    %p125 = scmp.eq.s32.totalorder %s19, 1
    %p126 = por %p124, %p125
    %p128 = scmp.ne.s32.totalorder %s113, %s127
    %p129 = scmp.eq.s32.totalorder %s19, 0
    %p130 = por %p128, %p129
    %s132 = sadd.s32 %s131, 1
    %p135 = scmp.eq.s32.totalorder %s13, 1
    %p136 = scmp.ne.s32.totalorder %s131, %s133
    %p137 = scmp.eq.s32.totalorder %s13, 0
    %p138 = por %p136, %p137
    %p139 = scmp.ne.s32.totalorder %s131, %s133
    %p140 = scmp.eq.s32.totalorder %s18, 1
    %p141 = por %p139, %p140
    %p142 = scmp.ne.s32.totalorder %s133, %s134
    %p143 = scmp.eq.s32.totalorder %s18, 0
    %p144 = por %p142, %p143
    %p145 = scmp.ne.s32.totalorder %s133, %s134
    %p146 = scmp.eq.s32.totalorder %s19, 1
    %p147 = por %p145, %p146
    %p149 = scmp.ne.s32.totalorder %s134, %s148
    %p150 = scmp.eq.s32.totalorder %s19, 0
    %p151 = por %p149, %p150
    %s153 = sadd.s32 %s152, 1
    %p156 = scmp.eq.s32.totalorder %s13, 1
    %p157 = scmp.ne.s32.totalorder %s152, %s154
    %p158 = scmp.eq.s32.totalorder %s13, 0
    %p159 = por %p157, %p158
    %p160 = scmp.ne.s32.totalorder %s152, %s154
    %p161 = scmp.eq.s32.totalorder %s18, 1
    %p162 = por %p160, %p161
    %p163 = scmp.ne.s32.totalorder %s154, %s155
    %p164 = scmp.eq.s32.totalorder %s18, 0
    %p165 = por %p163, %p164
    %p166 = scmp.ne.s32.totalorder %s154, %s155
    %p167 = scmp.eq.s32.totalorder %s19, 1
    %p168 = por %p166, %p167
    %p170 = scmp.ne.s32.totalorder %s155, %s169
    %p171 = scmp.eq.s32.totalorder %s19, 0
    %p172 = por %p170, %p171
    %s173 = ssub.s32 %s13, %s20
    %p174 = scmp.eq.s32.totalorder %s173, 0
    %s176 = sadd.s32 %s175, 1
    %s177 = scalar_select %p174, %s175, %s176
    %p180 = pneg %p174
    %p181 = scmp.eq.s32.totalorder %s13, 1
    %p182 = por %p180, %p181
    %p183 = scmp.ne.s32.totalorder %s175, %s178
    %p184 = scmp.eq.s32.totalorder %s13, 0
    %p185 = por %p183, %p184
    %p186 = scmp.ne.s32.totalorder %s175, %s178
    %p187 = scmp.eq.s32.totalorder %s18, 1
    %p188 = por %p186, %p187
    %p189 = scmp.ne.s32.totalorder %s178, %s179
    %p190 = scmp.eq.s32.totalorder %s18, 0
    %p191 = por %p189, %p190
    %p192 = scmp.ne.s32.totalorder %s178, %s179
    %p193 = scmp.eq.s32.totalorder %s19, 1
    %p194 = por %p192, %p193
    %p196 = scmp.ne.s32.totalorder %s179, %s195
    %p197 = scmp.eq.s32.totalorder %s19, 0
    %p198 = por %p196, %p197
    %p199 = scmp.le.s32.totalorder 1, %s13
    %p200 = scmp.lt.s32.totalorder %s13, 3
    %p201 = pnand %p199, %p200
    %p202 = pneg %p201
    // Predicated region
    $region9: #{enhanced_classifier_forward.1} parent=5 // pred_check
      _
    $region10: #{enhanced_classifier_forward.1} parent=5 // pred_check_branch
      %204 = sbr.rel (%p201) target = $region12
    $region11: #{enhanced_classifier_forward.1} parent=5 // pred_region
      %s205 = ssub.s32 %s13, 1
      // Predicated region
      $region13: #{enhanced_classifier_forward.1} parent=11 // pred_check
        %p206 = pneg %p60
      $region14: #{enhanced_classifier_forward.1} parent=11 // pred_check_branch
        %208 = sbr.rel (%p206) target = $region16
      $region15: #{enhanced_classifier_forward.1} parent=11 // pred_region
        _
      $region16: #{enhanced_classifier_forward.1} parent=11 // pred_fallthru
        _
      // Predicated region
      $region17: #{enhanced_classifier_forward.1} parent=11 // pred_check
        %p209 = pneg %p81
      $region18: #{enhanced_classifier_forward.1} parent=11 // pred_check_branch
        %211 = sbr.rel (%p209) target = $region20
      $region19: #{enhanced_classifier_forward.1} parent=11 // pred_region
        _
      $region20: #{enhanced_classifier_forward.1} parent=11 // pred_fallthru
        _
      // Predicated region
      $region21: #{enhanced_classifier_forward.1} parent=11 // pred_check
        %p212 = pneg %p102
      $region22: #{enhanced_classifier_forward.1} parent=11 // pred_check_branch
        %214 = sbr.rel (%p212) target = $region24
      $region23: #{enhanced_classifier_forward.1} parent=11 // pred_region
        _
      $region24: #{enhanced_classifier_forward.1} parent=11 // pred_fallthru
        _
      // Predicated region
      $region25: #{enhanced_classifier_forward.1} parent=11 // pred_check
        %p215 = pneg %p123
      $region26: #{enhanced_classifier_forward.1} parent=11 // pred_check_branch
        %217 = sbr.rel (%p215) target = $region28
      $region27: #{enhanced_classifier_forward.1} parent=11 // pred_region
        _
      $region28: #{enhanced_classifier_forward.1} parent=11 // pred_fallthru
        _
      // Predicated region
      $region29: #{enhanced_classifier_forward.1} parent=11 // pred_check
        %p218 = pneg %p144
      $region30: #{enhanced_classifier_forward.1} parent=11 // pred_check_branch
        %220 = sbr.rel (%p218) target = $region32
      $region31: #{enhanced_classifier_forward.1} parent=11 // pred_region
        _
      $region32: #{enhanced_classifier_forward.1} parent=11 // pred_fallthru
        _
      // Predicated region
      $region33: #{enhanced_classifier_forward.1} parent=11 // pred_check
        %p221 = pneg %p165
      $region34: #{enhanced_classifier_forward.1} parent=11 // pred_check_branch
        %223 = sbr.rel (%p221) target = $region36
      $region35: #{enhanced_classifier_forward.1} parent=11 // pred_region
        _
      $region36: #{enhanced_classifier_forward.1} parent=11 // pred_fallthru
        _
    $region12: #{enhanced_classifier_forward.1} parent=5 // pred_fallthru
      _
    %p224 = scmp.lt.s32.totalorder %s13, 2
    // Predicated region
    $region37: #{enhanced_classifier_forward.1} parent=5 // pred_check
      %p225 = pneg %p224
    $region38: #{enhanced_classifier_forward.1} parent=5 // pred_check_branch
      %227 = sbr.rel (%p225) target = $region40
    $region39: #{enhanced_classifier_forward.1} parent=5 // pred_region
      // Predicated region
      $region41: #{enhanced_classifier_forward.1} parent=39 // pred_check
        %p228 = pneg %p33
      $region42: #{enhanced_classifier_forward.1} parent=39 // pred_check_branch
        %230 = sbr.rel (%p228) target = $region44
      $region43: #{enhanced_classifier_forward.1} parent=39 // pred_region
        %p231 = scmp.lt.s32.totalorder %s13, 1
        %s232 = scalar_select %p231, %s13, 1
        %s233 = smul.addr %s232, 4
        %s234 = scalar_lea.vmem %s0, %s233
      $region44: #{enhanced_classifier_forward.1} parent=39 // pred_fallthru
        _
    $region40: #{enhanced_classifier_forward.1} parent=5 // pred_fallthru
      _
    %p235 = scmp.le.s32.totalorder 1, %s13
    %p236 = scmp.lt.s32.totalorder %s13, 3
    %p237 = pnand %p235, %p236
    %p238 = pneg %p237
    // Predicated region
    $region45: #{enhanced_classifier_forward.1} parent=5 // pred_check
      _
    $region46: #{enhanced_classifier_forward.1} parent=5 // pred_check_branch
      %240 = sbr.rel (%p237) target = $region48
    $region47: #{enhanced_classifier_forward.1} parent=5 // pred_region
      %s241 = ssub.s32 %s13, 1
      %p242 = scmp.lt.s32.totalorder %s18, 1
      %s243 = scalar_select %p242, %s18, 1
      %s244 = smul.addr %s243, 4
      %s245 = scalar_lea.vmem %s0, %s244
      %p246 = pneg %p39
      %p247 = pneg %p36
      %p248 = pneg %p60
      %p249 = pneg %p57
      %p250 = pneg %p81
      %p251 = pneg %p78
      %p252 = pneg %p102
      %p253 = pneg %p99
      %p254 = pneg %p123
      %p255 = pneg %p120
      %p256 = pneg %p144
      %p257 = pneg %p141
      %p258 = pneg %p165
      %p259 = pneg %p162
      %p260 = pneg %p191
      %p261 = pneg %p188
      %p262 = scmp.lt.s32.totalorder %s18, 1
      %s263 = scalar_select %p262, %s18, 1
      %s264 = smul.addr %s263, 8
      %s265 = scalar_lea.vmem %s7, %s264
      %p266 = scmp.lt.s32.totalorder %s18, 1
      %s267 = scalar_select %p266, %s18, 1
      %s268 = smul.addr %s267, 4
      %s269 = scalar_lea.vmem %s0, %s268
      %p270 = scmp.lt.s32.totalorder %s18, 1
      %s271 = scalar_select %p270, %s18, 1
      %s272 = smul.addr %s271, 8
      %s273 = scalar_lea.vmem %s7, %s272
      %v275 = vld [vmem:[%s269] sm:$0xf]
      %v276 = vld [vmem:[%s1] sm:$0xf]
      %v277 = vld [vmem:[%s1 + $0x4] sm:$0xf]
      %v278 = vld [vmem:[%s1 + $0x8] sm:$0xf]
      %v279 = vld [vmem:[%s1 + $0xc] sm:$0xf]
      %v280 = vld [vmem:[%s1 + $0x10] sm:$0xf]
      %v281 = vld [vmem:[%s1 + $0x14] sm:$0xf]
      %v282 = vld [vmem:[%s1 + $0x18] sm:$0xf]
      %v283 = vld [vmem:[%s2] sm:$0x1]
      %v285 = vlaneseq
      %v286 = vshrl.u32 %v285, 7
      %v287 = vsub.s32 0, %v286
      %v288 = vrot.slane %v283, %v287
      %v297 = vunpack.c.l.b16 %v276
      %v298 = vunpack.c.l.b16 %v277
      %v299 = vunpack.c.l.b16 %v278
      %v300 = vunpack.c.l.b16 %v279
      %v301 = vunpack.c.l.b16 %v280
      %v302 = vunpack.c.l.b16 %v281
      %v303 = vunpack.c.l.b16 %v282
      %v304 = vpack.c.b16 %v298, %v297
      %v305 = vpack.c.b16 %v300, %v299
      %v306 = vpack.c.b16 %v302, %v301
      %v307 = vpack.c.b16 %v303, %v303
      %vm311 = vcmask 457728
      %v313 = vsel %vm311, %v275, 0
      %vm315 = vcmask 1043456
      %v317 = vsel %vm315, %v307, 0
      %319 = vmatprep.subr.bf16.mxu0 0
      %320 = vmatpush1.bf16.msra.mxu0 %v304
      %321 = vmatprep.subr.bf16.mxu0 0
      %322 = vmatpush1.bf16.msra.mxu0 %v305
      %323 = vmatprep.subr.bf16.mxu0 0
      %324 = vmatpush1.bf16.msra.mxu0 %v306
      %325 = vmatprep.subr.bf16.mxu0 0
      %326 = vmatpush1.bf16.msra.mxu0 %v317
      %327 = vmatprep.subr.bf16.mxu0 0
      %328 = vmatpush1.bf16.msra.mxu0 0
      %329 = vmatprep.subr.bf16.mxu0 0
      %330 = vmatpush1.bf16.msra.mxu0 0
      %331 = vmatprep.subr.bf16.mxu0 0
      %332 = vmatpush1.bf16.msra.mxu0 0
      %333 = vmatprep.subr.bf16.mxu0 0
      %334 = vmatpush1.bf16.msra.mxu0 0
      %335 = vmatprep.subr.bf16.mxu0 0
      %336 = vmatpush1.bf16.msra.mxu0 0
      %337 = vmatprep.subr.bf16.mxu0 0
      %338 = vmatpush1.bf16.msra.mxu0 0
      %339 = vmatprep.subr.bf16.mxu0 0
      %340 = vmatpush1.bf16.msra.mxu0 0
      %341 = vmatprep.subr.bf16.mxu0 0
      %342 = vmatpush1.bf16.msra.mxu0 0
      %343 = vmatprep.subr.bf16.mxu0 0
      %344 = vmatpush1.bf16.msra.mxu0 0
      %345 = vmatprep.subr.bf16.mxu0 0
      %346 = vmatpush1.bf16.msra.mxu0 0
      %347 = vmatprep.subr.bf16.mxu0 0
      %348 = vmatpush1.bf16.msra.mxu0 0
      %349 = vmatprep.subr.bf16.mxu0 0
      %350 = vmatpush1.bf16.msra.mxu0 0
      %351 = vmatprep.mubr.bf16.mxu0 0
      %352 = vmatmul.mubr.bf16.gmra.mrb[0].mxu0 %v313
      %v353 = vpop.f32.mrb[0].mxu0
      %v354 = vadd.f32 %v288, %v353
      %v355 = vpop.f32.mrb[0].mxu0
      %v356 = vpop.f32.mrb[0].mxu0
      %v357 = vpop.f32.mrb[0].mxu0
      %358 = vdwg.mxu0
      %v359 = vmax.f32 %v354, 0.0
      %v360 = vpack.c.bf16 %v359, %v359
      %v361 = vld [vmem:[%s3] sm:$0xf]
      %v362 = vld [vmem:[%s3 + $0x4] sm:$0xf]
      %v363 = vld [vmem:[%s3 + $0x8] sm:$0xf]
      %v364 = vld [vmem:[%s3 + $0xc] sm:$0xf]
      %v365 = vld [vmem:[%s3 + $0x10] sm:$0xf]
      %v366 = vld [vmem:[%s3 + $0x14] sm:$0xf]
      %v367 = vld [vmem:[%s3 + $0x18] sm:$0xf]
      %v368 = vld [vmem:[%s3 + $0x1c] sm:$0xf]
      %v369 = vld [vmem:[%s4] sm:$0x1]
      %v371 = vlaneseq
      %v372 = vshrl.u32 %v371, 7
      %v373 = vsub.s32 0, %v372
      %v374 = vrot.slane %v369, %v373
      %v384 = vunpack.c.l.b16 %v361
      %v385 = vunpack.c.l.b16 %v362
      %v386 = vunpack.c.l.b16 %v363
      %v387 = vunpack.c.l.b16 %v364
      %v388 = vunpack.c.l.b16 %v365
      %v389 = vunpack.c.l.b16 %v366
      %v390 = vunpack.c.l.b16 %v367
      %v391 = vunpack.c.l.b16 %v368
      %v392 = vpack.c.b16 %v385, %v384
      %v393 = vpack.c.b16 %v387, %v386
      %v394 = vpack.c.b16 %v389, %v388
      %v395 = vpack.c.b16 %v391, %v390
      %vm400 = vcmask 523264
      %v402 = vsel %vm400, %v360, 0
      %404 = vmatprep.subr.bf16.mxu0 0
      %405 = vmatpush1.bf16.msra.mxu0 %v392
      %406 = vmatprep.subr.bf16.mxu0 0
      %407 = vmatpush1.bf16.msra.mxu0 %v393
      %408 = vmatprep.subr.bf16.mxu0 0
      %409 = vmatpush1.bf16.msra.mxu0 %v394
      %410 = vmatprep.subr.bf16.mxu0 0
      %411 = vmatpush1.bf16.msra.mxu0 %v395
      %412 = vmatprep.subr.bf16.mxu0 0
      %413 = vmatpush1.bf16.msra.mxu0 0
      %414 = vmatprep.subr.bf16.mxu0 0
      %415 = vmatpush1.bf16.msra.mxu0 0
      %416 = vmatprep.subr.bf16.mxu0 0
      %417 = vmatpush1.bf16.msra.mxu0 0
      %418 = vmatprep.subr.bf16.mxu0 0
      %419 = vmatpush1.bf16.msra.mxu0 0
      %420 = vmatprep.subr.bf16.mxu0 0
      %421 = vmatpush1.bf16.msra.mxu0 0
      %422 = vmatprep.subr.bf16.mxu0 0
      %423 = vmatpush1.bf16.msra.mxu0 0
      %424 = vmatprep.subr.bf16.mxu0 0
      %425 = vmatpush1.bf16.msra.mxu0 0
      %426 = vmatprep.subr.bf16.mxu0 0
      %427 = vmatpush1.bf16.msra.mxu0 0
      %428 = vmatprep.subr.bf16.mxu0 0
      %429 = vmatpush1.bf16.msra.mxu0 0
      %430 = vmatprep.subr.bf16.mxu0 0
      %431 = vmatpush1.bf16.msra.mxu0 0
      %432 = vmatprep.subr.bf16.mxu0 0
      %433 = vmatpush1.bf16.msra.mxu0 0
      %434 = vmatprep.subr.bf16.mxu0 0
      %435 = vmatpush1.bf16.msra.mxu0 0
      %436 = vmatprep.mubr.bf16.mxu0 0
      %437 = vmatmul.mubr.bf16.gmra.mrb[0].mxu0 %v402
      %v438 = vpop.f32.mrb[0].mxu0
      %v439 = vadd.f32 %v374, %v438
      %v440 = vpop.f32.mrb[0].mxu0
      %v441 = vpop.f32.mrb[0].mxu0
      %v442 = vpop.f32.mrb[0].mxu0
      %443 = vdwg.mxu0
      %v444 = vmax.f32 %v439, 0.0
      %v445 = vpack.c.bf16 %v444, %v444
      %v446 = vld [vmem:[%s5] sm:$0xf]
      %v447 = vld [vmem:[%s5 + $0x4] sm:$0xf]
      %v448 = vld [vmem:[%s5 + $0x8] sm:$0xf]
      %v449 = vld [vmem:[%s5 + $0xc] sm:$0xf]
      %v450 = vld [vmem:[%s6] sm:$0x1]
      %v452 = vlaneseq
      %v453 = vshrl.u32 %v452, 7
      %v454 = vsub.s32 0, %v453
      %v455 = vrot.slane %v450, %v454
      %v461 = vunpack.c.l.b16 %v446
      %v462 = vunpack.c.l.b16 %v447
      %v463 = vunpack.c.l.b16 %v448
      %v464 = vunpack.c.l.b16 %v449
      %v465 = vpack.c.b16 %v462, %v461
      %v466 = vpack.c.b16 %v464, %v463
      %vm469 = vcmask 261120
      %v471 = vsel %vm469, %v445, 0
      %473 = vmatprep.subr.bf16.mxu0 0
      %474 = vmatpush1.bf16.msra.mxu0 %v465
      %475 = vmatprep.subr.bf16.mxu0 0
      %476 = vmatpush1.bf16.msra.mxu0 %v466
      %477 = vmatprep.subr.bf16.mxu0 0
      %478 = vmatpush1.bf16.msra.mxu0 0
      %479 = vmatprep.subr.bf16.mxu0 0
      %480 = vmatpush1.bf16.msra.mxu0 0
      %481 = vmatprep.subr.bf16.mxu0 0
      %482 = vmatpush1.bf16.msra.mxu0 0
      %483 = vmatprep.subr.bf16.mxu0 0
      %484 = vmatpush1.bf16.msra.mxu0 0
      %485 = vmatprep.subr.bf16.mxu0 0
      %486 = vmatpush1.bf16.msra.mxu0 0
      %487 = vmatprep.subr.bf16.mxu0 0
      %488 = vmatpush1.bf16.msra.mxu0 0
      %489 = vmatprep.subr.bf16.mxu0 0
      %490 = vmatpush1.bf16.msra.mxu0 0
      %491 = vmatprep.subr.bf16.mxu0 0
      %492 = vmatpush1.bf16.msra.mxu0 0
      %493 = vmatprep.subr.bf16.mxu0 0
      %494 = vmatpush1.bf16.msra.mxu0 0
      %495 = vmatprep.subr.bf16.mxu0 0
      %496 = vmatpush1.bf16.msra.mxu0 0
      %497 = vmatprep.subr.bf16.mxu0 0
      %498 = vmatpush1.bf16.msra.mxu0 0
      %499 = vmatprep.subr.bf16.mxu0 0
      %500 = vmatpush1.bf16.msra.mxu0 0
      %501 = vmatprep.subr.bf16.mxu0 0
      %502 = vmatpush1.bf16.msra.mxu0 0
      %503 = vmatprep.subr.bf16.mxu0 0
      %504 = vmatpush1.bf16.msra.mxu0 0
      %505 = vmatprep.mubr.bf16.mxu0 0
      %506 = vmatmul.mubr.bf16.gmra.mrb[0].mxu0 %v471
      %v507 = vpop.f32.mrb[0].mxu0
      %v508 = vadd.f32 %v455, %v507
      %v509 = vpop.f32.mrb[0].mxu0
      %v510 = vpop.f32.mrb[0].mxu0
      %v511 = vpop.f32.mrb[0].mxu0
      %512 = vdwg.mxu0
      %513 = vst [vmem:[%s273] sm:$0xff] %v508
      %p514 = scmp.lt.s32.totalorder %s18, 1
      %s515 = scalar_select %p514, %s18, 1
      %s516 = smul.addr %s515, 8
      %s517 = scalar_lea.vmem %s7, %s516
      // Predicated region
      $region49: #{enhanced_classifier_forward.1} parent=47 // pred_check
        %p518 = pneg %p188
      $region50: #{enhanced_classifier_forward.1} parent=47 // pred_check_branch
        %520 = sbr.rel (%p518) target = $region52
      $region51: #{enhanced_classifier_forward.1} parent=47 // pred_region
        _
      $region52: #{enhanced_classifier_forward.1} parent=47 // pred_fallthru
        _
    $region48: #{enhanced_classifier_forward.1} parent=5 // pred_fallthru
      _
    %p521 = scmp.le.s32.totalorder 2, %s13
    // Predicated region
    $region53: #{enhanced_classifier_forward.1} parent=5 // pred_check
      %p522 = pneg %p521
    $region54: #{enhanced_classifier_forward.1} parent=5 // pred_check_branch
      %524 = sbr.rel (%p522) target = $region56
    $region55: #{enhanced_classifier_forward.1} parent=5 // pred_region
      %s525 = ssub.s32 %s13, 2
      // Predicated region
      $region57: #{enhanced_classifier_forward.1} parent=55 // pred_check
        %p526 = pneg %p194
      $region58: #{enhanced_classifier_forward.1} parent=55 // pred_check_branch
        %528 = sbr.rel (%p526) target = $region60
      $region59: #{enhanced_classifier_forward.1} parent=55 // pred_region
        %p529 = scmp.lt.s32.totalorder %s19, 1
        %s530 = scalar_select %p529, %s19, 1
        %s531 = smul.addr %s530, 8
        %s532 = scalar_lea.vmem %s7, %s531
      $region60: #{enhanced_classifier_forward.1} parent=55 // pred_fallthru
        _
    $region56: #{enhanced_classifier_forward.1} parent=5 // pred_fallthru
      _
  $region6: #{enhanced_classifier_forward.1} parent=0 // loop_footer
    %s17 = sadd.s32 1, %s13
  $region7: #{enhanced_classifier_forward.1} parent=0 // loop_footer_branch
    %12 = sbr.rel target = $region3
  $region8: #{enhanced_classifier_forward.1} parent=0 // loop_exit
    _

</llo_original>
